<compile_context>
chip_gen: v7x
topology: tpu7x:2x2x1
jax: 0.10.0
libtpu: 0.0.40
codegen_flags: <defaults>
</compile_context>

<pallas_src>
import jax
import jax.numpy as jnp
from jax import lax
from jax.experimental import pallas as pl
from jax.experimental.pallas import tpu as pltpu


def _round_up(x, m):
    return (x + m - 1) // m * m


# ----------------------------------------------------------------------------
# Fused MLP kernel: one grid step = one batch tile, all layers + weights in VMEM.
# ----------------------------------------------------------------------------
def make_critic_kernel(num_layer, compute_dtype):
    """kernel(x_ref, w1, b1, ..., wL, bL, out_ref).

    The last weight is pre-reshaped to (1, fin) by the wrapper so the final layer
    can be computed transposed and stored lane-dense.
    """

    def kernel(x_ref, *refs):
        out_ref = refs[-1]
        wb = refs[:-1]                                        # [w1, b1, ..., wL, bL]
        h = x_ref[...]                                        # (tb, in_dim) f32

        # Hidden layers: bf16 MXU matmul (f32 accumulation) + f32 bias + tanh.
        for i in range(num_layer - 1):                        # static unroll
            w = wb[2 * i][...].astype(compute_dtype)
            b = wb[2 * i + 1][...]                            # (1, fout) f32
            h = jnp.dot(h.astype(compute_dtype), w,
                        preferred_element_type=jnp.float32) + b
            h = jnp.tanh(h)

        # Output layer (out_features == 1), computed transposed so the result is a
        # lane-dense row:  v_row[1, tb] = w_last[1, fin] . h[tb, fin]^T + b_last.
        w_last = wb[-2][...].astype(compute_dtype)            # (1, fin_last)
        b_last = wb[-1][...]                                  # (1, 1) f32
        v_row = lax.dot_general(
            w_last, h.astype(compute_dtype),
            dimension_numbers=(((1,), (1,)), ((), ())),
            preferred_element_type=jnp.float32) + b_last      # (1, tb)

        out_ref[...] = v_row[None].astype(out_ref.dtype)      # (1, 1, tb)

    return kernel


def _pick_block_b(batch):
    # ~half the batch (so the grid has >= 2 steps for v7x megacore), rounded to a
    # multiple of 8 sublanes, capped at 512 rows, floor of 8.
    half = _round_up(max(1, (batch + 1) // 2), 8)
    return max(8, min(512, half))


def critic_ppo_forward(state, params, *, block_b=None, compute_dtype=jnp.bfloat16):
    """CriticPPO.forward(state) -> value[B, 1], fused into a single pallas_call.

    params: flat list [w1, b1, ..., wL, bL]; w_i: [fin, fout], b_i: [1, fout]
            (PyTorch layout; last layer has fout == 1).
    """
    B, state_dim = state.shape
    num_layer = len(params) // 2

    if block_b is None:
        block_b = _pick_block_b(B)
    num_tiles = pl.cdiv(B, block_b)
    rows = num_tiles * block_b            # rows actually computed; tail rows discarded

    # Pass the final (fin, 1) weight as a (1, fin) row for the transposed last layer.
    kparams = list(params[:-2]) + [params[-2].reshape(1, -1), params[-1]]

    kernel = make_critic_kernel(num_layer, compute_dtype)

    in_specs = [pl.BlockSpec((block_b, state_dim), lambda i: (i, 0))]
    # Weights/biases: whole-array, VMEM-resident, single-buffered.
    in_specs += [pl.BlockSpec(memory_space=pltpu.MemorySpace.VMEM) for _ in kparams]

    out_specs = pl.BlockSpec((1, 1, block_b), lambda i: (i, 0, 0))

    # Advisory cost estimate for the surrounding jit.
    macs = sum(int(w.shape[0] * w.shape[1]) for w in params[0::2])
    hidden_widths = sum(int(params[2 * i].shape[1]) for i in range(num_layer - 1))
    param_bytes = int(sum(p.size * p.dtype.itemsize for p in params))
    cost = pl.CostEstimate(
        flops=2 * rows * macs,
        transcendentals=rows * hidden_widths,
        bytes_accessed=int(state.size * state.dtype.itemsize) + param_bytes + rows * 4,
    )

    # Explicit VMEM budget: resident params (single-buffered) + double-buffered
    # input/output tiles + activation headroom; capped at 64 MiB (v7x physical).
    max_w = max([state_dim] + [int(w.shape[1]) for w in params[0::2]])
    act_bytes = (2 * block_b * state_dim * 4        # input tile (double-buffered)
                 + 2 * block_b * 4                  # lane-dense output tile
                 + 4 * block_b * max_w * 4)         # live activations / casts
    vmem_limit = int(min(64 << 20, max(32 << 20, 2 * (param_bytes + act_bytes))))

    out = pl.pallas_call(
        kernel,
        out_shape=jax.ShapeDtypeStruct((num_tiles, 1, block_b), jnp.float32),
        grid=(num_tiles,),
        in_specs=in_specs,
        out_specs=out_specs,
        cost_estimate=cost,
        compiler_params=pltpu.CompilerParams(
            dimension_semantics=("parallel",),      # megacore split on v7x
            vmem_limit_bytes=vmem_limit,
        ),
    )(state, *kparams)

    return out.reshape(rows, 1)[:B]


# ----------------------------------------------------------------------------
# Parameter init (deterministic, PyTorch nn.Linear-style uniform init)
# ----------------------------------------------------------------------------
def init_critic_params(key, mid_dim, num_layer, state_dim, out_dim=1):
    assert num_layer >= 1
    if num_layer == 1:
        dims = [(state_dim, out_dim)]
    else:
        dims = ([(state_dim, mid_dim)]
                + [(mid_dim, mid_dim)] * (num_layer - 2)
                + [(mid_dim, out_dim)])
    params = []
    for fin, fout in dims:
        key, kw, kb = jax.random.split(key, 3)
        bound = 1.0 / (fin ** 0.5)
        w = jax.random.uniform(kw, (fin, fout), jnp.float32, -bound, bound)
        b = jax.random.uniform(kb, (1, fout), jnp.float32, -bound, bound)
        params += [w, b]
    return params


# ----------------------------------------------------------------------------
# Pure-JAX fp32 reference (for correctness check)
# ----------------------------------------------------------------------------
def critic_ppo_reference(state, params):
    h = state
    n = len(params) // 2
    for i in range(n):
        h = h @ params[2 * i] + params[2 * i + 1]
        if i < n - 1:
            h = jnp.tanh(h)
    return h


# ----------------------------------------------------------------------------
# Demo
# ----------------------------------------------------------------------------
if __name__ == "__main__":
    key = jax.random.PRNGKey(0)
    B = 16               # batch of states
    state_dim = 32       # state feature dim
    mid_dim = 128        # MLP hidden width
    num_layer = 3        # Linear-Tanh-Linear-Tanh-Linear

    key, k_state, k_params = jax.random.split(key, 3)
    state = jax.random.normal(k_state, (B, state_dim), jnp.float32)
    params = init_critic_params(k_params, mid_dim, num_layer, state_dim)

    value = critic_ppo_forward(state, params)
    jax.block_until_ready(value)

    assert value.shape == (B, 1), value.shape
    ref = critic_ppo_reference(state, params)
    # bf16 MXU operands (f32 accumulation) -> relaxed tolerance vs the fp32 reference.
    err = float(jnp.max(jnp.abs(value - ref)))
    assert err < 5e-2, err
    print("KERNEL_OK")
</pallas_src>

<mosaic_0001>
module attributes {stable_mosaic.version = 11 : i64} {
  func.func @kernel(%arg0: i32, %arg1: memref<8x32xf32, #tpu.memory_space<vmem>>, %arg2: memref<32x128xf32, #tpu.memory_space<vmem>>, %arg3: memref<1x128xf32, #tpu.memory_space<vmem>>, %arg4: memref<128x128xf32, #tpu.memory_space<vmem>>, %arg5: memref<1x128xf32, #tpu.memory_space<vmem>>, %arg6: memref<1x128xf32, #tpu.memory_space<vmem>>, %arg7: memref<1x1xf32, #tpu.memory_space<vmem>>, %arg8: memref<1x1x8xf32, #tpu.memory_space<vmem>>) attributes {dimension_semantics = [#tpu.dimension_semantics<parallel>], iteration_bounds = array<i64: 2>, scalar_prefetch = 0 : i64, scratch_operands = 0 : i64, tpu.core_type = #tpu.core_type<tc>, window_params = [{transform_indices = @transform_0, window_bounds = array<i64: 8, 32>}, {pipeline_mode = #tpu.pipeline_mode<synchronous>, transform_indices = @transform_1, window_bounds = array<i64: 32, 128>}, {pipeline_mode = #tpu.pipeline_mode<synchronous>, transform_indices = @transform_2, window_bounds = array<i64: 1, 128>}, {pipeline_mode = #tpu.pipeline_mode<synchronous>, transform_indices = @transform_3, window_bounds = array<i64: 128, 128>}, {pipeline_mode = #tpu.pipeline_mode<synchronous>, transform_indices = @transform_4, window_bounds = array<i64: 1, 128>}, {pipeline_mode = #tpu.pipeline_mode<synchronous>, transform_indices = @transform_5, window_bounds = array<i64: 1, 128>}, {pipeline_mode = #tpu.pipeline_mode<synchronous>, transform_indices = @transform_6, window_bounds = array<i64: 1, 1>}, {transform_indices = @transform_7, window_bounds = array<i64: 1, 1, 8>}]} {
    %c0 = arith.constant 0 : index
    %c0_0 = arith.constant 0 : index
    %0 = vector.load %arg1[%c0, %c0_0] : memref<8x32xf32, #tpu.memory_space<vmem>>, vector<8x32xf32>
    %c0_1 = arith.constant 0 : index
    %c0_2 = arith.constant 0 : index
    %1 = vector.load %arg2[%c0_1, %c0_2] : memref<32x128xf32, #tpu.memory_space<vmem>>, vector<32x128xf32>
    %2 = arith.truncf %1 : vector<32x128xf32> to vector<32x128xbf16>
    %c0_3 = arith.constant 0 : index
    %c0_4 = arith.constant 0 : index
    %3 = vector.load %arg3[%c0_3, %c0_4] : memref<1x128xf32, #tpu.memory_space<vmem>>, vector<1x128xf32>
    %4 = arith.truncf %0 : vector<8x32xf32> to vector<8x32xbf16>
    %cst = arith.constant dense<0.000000e+00> : vector<8x128xf32>
    %5 = tpu.matmul %4, %2, %cst {dimension_numbers = #tpu.dot_dimension_numbers<[1], [0], [0], [1], [0, 0, 1, 1], [], []>} : vector<8x32xbf16>, vector<32x128xbf16>, vector<8x128xf32> -> vector<8x128xf32>
    %6 = vector.broadcast %3 : vector<1x128xf32> to vector<8x128xf32>
    %7 = arith.addf %5, %6 : vector<8x128xf32>
    %8 = math.tanh %7 : vector<8x128xf32>
    %c0_5 = arith.constant 0 : index
    %c0_6 = arith.constant 0 : index
    %9 = vector.load %arg4[%c0_5, %c0_6] : memref<128x128xf32, #tpu.memory_space<vmem>>, vector<128x128xf32>
    %10 = arith.truncf %9 : vector<128x128xf32> to vector<128x128xbf16>
    %c0_7 = arith.constant 0 : index
    %c0_8 = arith.constant 0 : index
    %11 = vector.load %arg5[%c0_7, %c0_8] : memref<1x128xf32, #tpu.memory_space<vmem>>, vector<1x128xf32>
    %12 = arith.truncf %8 : vector<8x128xf32> to vector<8x128xbf16>
    %cst_9 = arith.constant dense<0.000000e+00> : vector<8x128xf32>
    %13 = tpu.matmul %12, %10, %cst_9 {dimension_numbers = #tpu.dot_dimension_numbers<[1], [0], [0], [1], [0, 0, 1, 1], [], []>} : vector<8x128xbf16>, vector<128x128xbf16>, vector<8x128xf32> -> vector<8x128xf32>
    %14 = vector.broadcast %11 : vector<1x128xf32> to vector<8x128xf32>
    %15 = arith.addf %13, %14 : vector<8x128xf32>
    %16 = math.tanh %15 : vector<8x128xf32>
    %c0_10 = arith.constant 0 : index
    %c0_11 = arith.constant 0 : index
    %17 = vector.load %arg6[%c0_10, %c0_11] : memref<1x128xf32, #tpu.memory_space<vmem>>, vector<1x128xf32>
    %18 = arith.truncf %17 : vector<1x128xf32> to vector<1x128xbf16>
    %c0_12 = arith.constant 0 : index
    %c0_13 = arith.constant 0 : index
    %19 = vector.load %arg7[%c0_12, %c0_13] : memref<1x1xf32, #tpu.memory_space<vmem>>, vector<1x1xf32>
    %20 = arith.truncf %16 : vector<8x128xf32> to vector<8x128xbf16>
    %cst_14 = arith.constant dense<0.000000e+00> : vector<1x8xf32>
    %21 = tpu.matmul %18, %20, %cst_14 {dimension_numbers = #tpu.dot_dimension_numbers<[1], [1], [0], [0], [0, 0, 1, 0], [], []>} : vector<1x128xbf16>, vector<8x128xbf16>, vector<1x8xf32> -> vector<1x8xf32>
    %22 = vector.broadcast %19 : vector<1x1xf32> to vector<1x8xf32>
    %23 = arith.addf %21, %22 : vector<1x8xf32>
    %24 = vector.shape_cast %23 : vector<1x8xf32> to vector<1x1x8xf32>
    %c0_15 = arith.constant 0 : index
    %c0_16 = arith.constant 0 : index
    %c0_17 = arith.constant 0 : index
    %25 = vector.load %arg8[%c0_15, %c0_16, %c0_17] : memref<1x1x8xf32, #tpu.memory_space<vmem>>, vector<1x1x8xf32>
    tpu.vector_store %arg8[%c0_15, %c0_16, %c0_17], %24 {strides = array<i32>} : memref<1x1x8xf32, #tpu.memory_space<vmem>>, vector<1x1x8xf32>,
    return
  }
  func.func @transform_0(%arg0: i32) -> (i32, i32) {
    %c0_i32 = arith.constant 0 : i32
    %c0_i32_0 = arith.constant 0 : i32
    return %arg0, %c0_i32 : i32, i32
  }
  func.func @transform_1(%arg0: i32) -> (i32, i32) {
    %c0_i32 = arith.constant 0 : i32
    %c0_i32_0 = arith.constant 0 : i32
    %c0_i32_1 = arith.constant 0 : i32
    return %c0_i32, %c0_i32_0 : i32, i32
  }
  func.func @transform_2(%arg0: i32) -> (i32, i32) {
    %c0_i32 = arith.constant 0 : i32
    %c0_i32_0 = arith.constant 0 : i32
    %c0_i32_1 = arith.constant 0 : i32
    return %c0_i32, %c0_i32_0 : i32, i32
  }
  func.func @transform_3(%arg0: i32) -> (i32, i32) {
    %c0_i32 = arith.constant 0 : i32
    %c0_i32_0 = arith.constant 0 : i32
    %c0_i32_1 = arith.constant 0 : i32
    return %c0_i32, %c0_i32_0 : i32, i32
  }
  func.func @transform_4(%arg0: i32) -> (i32, i32) {
    %c0_i32 = arith.constant 0 : i32
    %c0_i32_0 = arith.constant 0 : i32
    %c0_i32_1 = arith.constant 0 : i32
    return %c0_i32, %c0_i32_0 : i32, i32
  }
  func.func @transform_5(%arg0: i32) -> (i32, i32) {
    %c0_i32 = arith.constant 0 : i32
    %c0_i32_0 = arith.constant 0 : i32
    %c0_i32_1 = arith.constant 0 : i32
    return %c0_i32, %c0_i32_0 : i32, i32
  }
  func.func @transform_6(%arg0: i32) -> (i32, i32) {
    %c0_i32 = arith.constant 0 : i32
    %c0_i32_0 = arith.constant 0 : i32
    %c0_i32_1 = arith.constant 0 : i32
    return %c0_i32, %c0_i32_0 : i32, i32
  }
  func.func @transform_7(%arg0: i32) -> (i32, i32, i32) {
    %c0_i32 = arith.constant 0 : i32
    %c0_i32_0 = arith.constant 0 : i32
    %c0_i32_1 = arith.constant 0 : i32
    return %arg0, %c0_i32, %c0_i32_0 : i32, i32, i32
  }
}

</mosaic_0001>

<llo_original>
// kernel: tpu_custom_call.1
$region0: #{tpu_custom_call.1}
  #allocation0 [shape = 'u32[]', space=smem, size = 0x4, offset = 0x4, fixed_abs, tag = 'smem constant byte address 0x4 - core index']
  #allocation1 [shape = 'u32[144,128]{1,0:T(1,128)}', space=vmem, size = 0x12000, scoped, tag = 'internal scratch']
  #allocation2 [shape = 'f32[1,1]{1,0:T(1,128)S(1)}', space=vmem, size = 0x200, scoped, tag = 'scoped memory for tpu_custom_call.1']
  %s0 = inlined_call_operand.hbm [shape: f32[16,32], index: 0, kind: input, shape index: {}]
  %s1 = inlined_call_operand.hbm [shape: f32[32,128], index: 1, kind: input, shape index: {}]
  %s2 = inlined_call_operand.vmem [shape: f32[1,128], index: 2, kind: input, shape index: {}]
  %s3 = inlined_call_operand.hbm [shape: f32[128,128], index: 3, kind: input, shape index: {}]
  %s4 = inlined_call_operand.vmem [shape: f32[1,128], index: 4, kind: input, shape index: {}]
  %s5 = inlined_call_operand.vmem [shape: f32[1,128], index: 5, kind: input, shape index: {}]
  %s6 = inlined_call_operand.<no memory space> [shape: f32[1,1], index: 6, kind: input, shape index: {}]
  %s7 = inlined_call_operand.hbm [shape: f32[2,1,8], index: 7, kind: output, shape index: {}]
  %s8 = sld [smem:[#allocation0]]
  $region73: #{tpu_custom_call.1} parent=0
    _
  %s10 = ssub.s32 1, %s8
  %s11 = scalar_select 0, %s10, %s8
  %v12 = vstv %s6
  %13 = vst [vmem:[#allocation2] sm:$0x1] %v12
  $region1: #{tpu_custom_call.1} parent=0
    #allocation3 [shape = 'u8[8192]{0}', space=vmem, size = 0x2000, scoped, tag = 'input window, operand 0']
    #allocation4 [shape = 's32[2]{0}', space=sflag, size = 0x8, scoped, tag = 'scoped memory for tpu_custom_call.1']
    #allocation5 [shape = 's32[2]{0}', space=sflag, size = 0x8, scoped, tag = 'scoped memory for tpu_custom_call.1']
    #allocation6 [shape = 'u8[16384]{0}', space=vmem, size = 0x4000, scoped, tag = 'input window, operand 1, single buffered']
    #allocation7 [shape = 's32[1]{0}', space=sflag, size = 0x4, scoped, tag = 'scoped memory for tpu_custom_call.1']
    #allocation8 [shape = 'u8[65536]{0}', space=vmem, size = 0x10000, scoped, tag = 'input window, operand 3, single buffered']
    #allocation9 [shape = 'u8[1024]{0}', space=vmem, size = 0x400, scoped, tag = 'output window, operand 0']
    %14 = vsyncpa [#allocation4], 0
    %s15 = scalar_lea.sflag [#allocation4], 1
    %16 = vsyncpa %s15, 0
    %17 = vsyncpa [#allocation7], 0
    %18 = vsyncpa [#allocation5], 0
    %s19 = scalar_lea.sflag [#allocation5], 1
    %20 = vsyncpa %s19, 0
    loop: start=0, step=1, limit=4
    $region2: #{tpu_custom_call.1} parent=1 // loop_pre_header
      _
    $region3: #{tpu_custom_call.1} parent=1 // loop_header
      %s22 = sphi 0, %s26
      %p23 = scmp.ge.s32.totalorder %s22, 4
      %s32 = sphi 0, %s34
      %s35 = sphi 0, %s32
      %s36 = sphi 0, %s35
      %s52 = sphi 0, %s36
      %s56 = sphi 0, %s56
      %s58 = sphi 0, %s56
      %s59 = sphi 0, %s58
      %s73 = sphi 0, %s59
      %s77 = sphi 0, %s77
      %s79 = sphi 0, %s77
      %s80 = sphi 0, %s79
      %s94 = sphi 0, %s80
      %s98 = sphi 0, %s98
      %s100 = sphi 0, %s98
      %s101 = sphi 0, %s100
      %s115 = sphi 0, %s101
      %s119 = sphi 0, %s119
      %s121 = sphi 0, %s119
      %s122 = sphi 0, %s121
      %s136 = sphi 0, %s122
      %s140 = sphi 0, %s140
      %s142 = sphi 0, %s140
      %s143 = sphi 0, %s142
      %s157 = sphi 0, %s143
      %s161 = sphi 0, %s161
      %s163 = sphi 0, %s161
      %s164 = sphi 0, %s163
      %s178 = sphi 0, %s164
      %s184 = sphi 0, %s186
      %s187 = sphi 0, %s184
      %s188 = sphi 0, %s187
      %s204 = sphi 0, %s188
    $region4: #{tpu_custom_call.1} parent=1 // loop_header_branch
      %25 = sbr.rel (%p23) target = $region8
    $region5: #{tpu_custom_call.1} parent=1 // loop_body
      %s27 = ssub.s32 %s22, 1
      %s28 = ssub.s32 %s22, 2
      %s29 = sadd.s32 %s22, 1
      %s30 = ssub.s32 %s22, %s29
      %p31 = scmp.eq.s32.totalorder %s30, 0
      %s33 = sadd.s32 %s32, 1
      %s34 = scalar_select %p31, %s32, %s33
      %p37 = pneg %p31
      %p38 = scmp.eq.s32.totalorder %s22, 1
      %p39 = por %p37, %p38
      %p40 = scmp.ne.s32.totalorder %s32, %s35
      %p41 = scmp.eq.s32.totalorder %s22, 0
      %p42 = por %p40, %p41
      %p43 = scmp.ne.s32.totalorder %s32, %s35
      %p44 = scmp.eq.s32.totalorder %s27, 1
      %p45 = por %p43, %p44
      %p46 = scmp.ne.s32.totalorder %s35, %s36
      %p47 = scmp.eq.s32.totalorder %s27, 0
      %p48 = por %p46, %p47
      %p49 = scmp.ne.s32.totalorder %s35, %s36
      %p50 = scmp.eq.s32.totalorder %s28, 1
      %p51 = por %p49, %p50
      %p53 = scmp.ne.s32.totalorder %s36, %s52
      %p54 = scmp.eq.s32.totalorder %s28, 0
      %p55 = por %p53, %p54
      %s57 = sadd.s32 %s56, 1
      %p60 = scmp.eq.s32.totalorder %s22, 1
      %p61 = scmp.ne.s32.totalorder %s56, %s58
      %p62 = scmp.eq.s32.totalorder %s22, 0
      %p63 = por %p61, %p62
      %p64 = scmp.ne.s32.totalorder %s56, %s58
      %p65 = scmp.eq.s32.totalorder %s27, 1
      %p66 = por %p64, %p65
      %p67 = scmp.ne.s32.totalorder %s58, %s59
      %p68 = scmp.eq.s32.totalorder %s27, 0
      %p69 = por %p67, %p68
      %p70 = scmp.ne.s32.totalorder %s58, %s59
      %p71 = scmp.eq.s32.totalorder %s28, 1
      %p72 = por %p70, %p71
      %p74 = scmp.ne.s32.totalorder %s59, %s73
      %p75 = scmp.eq.s32.totalorder %s28, 0
      %p76 = por %p74, %p75
      %s78 = sadd.s32 %s77, 1
      %p81 = scmp.eq.s32.totalorder %s22, 1
      %p82 = scmp.ne.s32.totalorder %s77, %s79
      %p83 = scmp.eq.s32.totalorder %s22, 0
      %p84 = por %p82, %p83
      %p85 = scmp.ne.s32.totalorder %s77, %s79
      %p86 = scmp.eq.s32.totalorder %s27, 1
      %p87 = por %p85, %p86
      %p88 = scmp.ne.s32.totalorder %s79, %s80
      %p89 = scmp.eq.s32.totalorder %s27, 0
      %p90 = por %p88, %p89
      %p91 = scmp.ne.s32.totalorder %s79, %s80
      %p92 = scmp.eq.s32.totalorder %s28, 1
      %p93 = por %p91, %p92
      %p95 = scmp.ne.s32.totalorder %s80, %s94
      %p96 = scmp.eq.s32.totalorder %s28, 0
      %p97 = por %p95, %p96
      %s99 = sadd.s32 %s98, 1
      %p102 = scmp.eq.s32.totalorder %s22, 1
      %p103 = scmp.ne.s32.totalorder %s98, %s100
      %p104 = scmp.eq.s32.totalorder %s22, 0
      %p105 = por %p103, %p104
      %p106 = scmp.ne.s32.totalorder %s98, %s100
      %p107 = scmp.eq.s32.totalorder %s27, 1
      %p108 = por %p106, %p107
      %p109 = scmp.ne.s32.totalorder %s100, %s101
      %p110 = scmp.eq.s32.totalorder %s27, 0
      %p111 = por %p109, %p110
      %p112 = scmp.ne.s32.totalorder %s100, %s101
      %p113 = scmp.eq.s32.totalorder %s28, 1
      %p114 = por %p112, %p113
      %p116 = scmp.ne.s32.totalorder %s101, %s115
      %p117 = scmp.eq.s32.totalorder %s28, 0
      %p118 = por %p116, %p117
      %s120 = sadd.s32 %s119, 1
      %p123 = scmp.eq.s32.totalorder %s22, 1
      %p124 = scmp.ne.s32.totalorder %s119, %s121
      %p125 = scmp.eq.s32.totalorder %s22, 0
      %p126 = por %p124, %p125
      %p127 = scmp.ne.s32.totalorder %s119, %s121
      %p128 = scmp.eq.s32.totalorder %s27, 1
      %p129 = por %p127, %p128
      %p130 = scmp.ne.s32.totalorder %s121, %s122
      %p131 = scmp.eq.s32.totalorder %s27, 0
      %p132 = por %p130, %p131
      %p133 = scmp.ne.s32.totalorder %s121, %s122
      %p134 = scmp.eq.s32.totalorder %s28, 1
      %p135 = por %p133, %p134
      %p137 = scmp.ne.s32.totalorder %s122, %s136
      %p138 = scmp.eq.s32.totalorder %s28, 0
      %p139 = por %p137, %p138
      %s141 = sadd.s32 %s140, 1
      %p144 = scmp.eq.s32.totalorder %s22, 1
      %p145 = scmp.ne.s32.totalorder %s140, %s142
      %p146 = scmp.eq.s32.totalorder %s22, 0
      %p147 = por %p145, %p146
      %p148 = scmp.ne.s32.totalorder %s140, %s142
      %p149 = scmp.eq.s32.totalorder %s27, 1
      %p150 = por %p148, %p149
      %p151 = scmp.ne.s32.totalorder %s142, %s143
      %p152 = scmp.eq.s32.totalorder %s27, 0
      %p153 = por %p151, %p152
      %p154 = scmp.ne.s32.totalorder %s142, %s143
      %p155 = scmp.eq.s32.totalorder %s28, 1
      %p156 = por %p154, %p155
      %p158 = scmp.ne.s32.totalorder %s143, %s157
      %p159 = scmp.eq.s32.totalorder %s28, 0
      %p160 = por %p158, %p159
      %s162 = sadd.s32 %s161, 1
      %p165 = scmp.eq.s32.totalorder %s22, 1
      %p166 = scmp.ne.s32.totalorder %s161, %s163
      %p167 = scmp.eq.s32.totalorder %s22, 0
      %p168 = por %p166, %p167
      %p169 = scmp.ne.s32.totalorder %s161, %s163
      %p170 = scmp.eq.s32.totalorder %s27, 1
      %p171 = por %p169, %p170
      %p172 = scmp.ne.s32.totalorder %s163, %s164
      %p173 = scmp.eq.s32.totalorder %s27, 0
      %p174 = por %p172, %p173
      %p175 = scmp.ne.s32.totalorder %s163, %s164
      %p176 = scmp.eq.s32.totalorder %s28, 1
      %p177 = por %p175, %p176
      %p179 = scmp.ne.s32.totalorder %s164, %s178
      %p180 = scmp.eq.s32.totalorder %s28, 0
      %p181 = por %p179, %p180
      %s182 = ssub.s32 %s22, %s29
      %p183 = scmp.eq.s32.totalorder %s182, 0
      %s185 = sadd.s32 %s184, 1
      %s186 = scalar_select %p183, %s184, %s185
      %p189 = pneg %p183
      %p190 = scmp.eq.s32.totalorder %s22, 1
      %p191 = por %p189, %p190
      %p192 = scmp.ne.s32.totalorder %s184, %s187
      %p193 = scmp.eq.s32.totalorder %s22, 0
      %p194 = por %p192, %p193
      %p195 = scmp.ne.s32.totalorder %s184, %s187
      %p196 = scmp.eq.s32.totalorder %s27, 1
      %p197 = por %p195, %p196
      %p198 = scmp.ne.s32.totalorder %s187, %s188
      %p199 = scmp.eq.s32.totalorder %s27, 0
      %p200 = por %p198, %p199
      %p201 = scmp.ne.s32.totalorder %s187, %s188
      %p202 = scmp.eq.s32.totalorder %s28, 1
      %p203 = por %p201, %p202
      %p205 = scmp.ne.s32.totalorder %s188, %s204
      %p206 = scmp.eq.s32.totalorder %s28, 0
      %p207 = por %p205, %p206
      %p208 = scmp.le.s32.totalorder 1, %s22
      %p209 = scmp.lt.s32.totalorder %s22, 3
      %p210 = pnand %p208, %p209
      %p211 = pneg %p210
      // Predicated region
      $region9: #{tpu_custom_call.1} parent=5 // pred_check
        _
      $region10: #{tpu_custom_call.1} parent=5 // pred_check_branch
        %213 = sbr.rel (%p210) target = $region12
      $region11: #{tpu_custom_call.1} parent=5 // pred_region
        %s214 = ssub.s32 %s22, 1
        // Predicated region
        $region13: #{tpu_custom_call.1} parent=11 // pred_check
          %p215 = pneg %p69
        $region14: #{tpu_custom_call.1} parent=11 // pred_check_branch
          %217 = sbr.rel (%p215) target = $region16
        $region15: #{tpu_custom_call.1} parent=11 // pred_region
          %s219 = ssub.s32 512, 512
          %220 = vsyncadd [#allocation7], %s219
          %s221 = sshll.u32 [#allocation6], 4
          %s222 = int_to_ptr.vmem [resolvable:$true] %s221
          %227 = dma.hbm_to_vmem [thread:$0]  %s1, 512, %s222, [#allocation7], 128, 128, 8
        $region16: #{tpu_custom_call.1} parent=11 // pred_fallthru
          _
        // Predicated region
        $region17: #{tpu_custom_call.1} parent=11 // pred_check
          %p228 = pneg %p90
        $region18: #{tpu_custom_call.1} parent=11 // pred_check_branch
          %230 = sbr.rel (%p228) target = $region20
        $region19: #{tpu_custom_call.1} parent=11 // pred_region
          _
        $region20: #{tpu_custom_call.1} parent=11 // pred_fallthru
          _
        // Predicated region
        $region21: #{tpu_custom_call.1} parent=11 // pred_check
          %p231 = pneg %p111
        $region22: #{tpu_custom_call.1} parent=11 // pred_check_branch
          %233 = sbr.rel (%p231) target = $region24
        $region23: #{tpu_custom_call.1} parent=11 // pred_region
          %s235 = ssub.s32 2048, 2048
          %236 = vsyncadd [#allocation7], %s235
          %s237 = sshll.u32 [#allocation8], 4
          %s238 = int_to_ptr.vmem [resolvable:$true] %s237
          %243 = dma.hbm_to_vmem [thread:$0]  %s3, 2048, %s238, [#allocation7], 128, 128, 8
        $region24: #{tpu_custom_call.1} parent=11 // pred_fallthru
          _
        // Predicated region
        $region25: #{tpu_custom_call.1} parent=11 // pred_check
          %p244 = pneg %p132
        $region26: #{tpu_custom_call.1} parent=11 // pred_check_branch
          %246 = sbr.rel (%p244) target = $region28
        $region27: #{tpu_custom_call.1} parent=11 // pred_region
          _
        $region28: #{tpu_custom_call.1} parent=11 // pred_fallthru
          _
        // Predicated region
        $region29: #{tpu_custom_call.1} parent=11 // pred_check
          %p247 = pneg %p153
        $region30: #{tpu_custom_call.1} parent=11 // pred_check_branch
          %249 = sbr.rel (%p247) target = $region32
        $region31: #{tpu_custom_call.1} parent=11 // pred_region
          _
        $region32: #{tpu_custom_call.1} parent=11 // pred_fallthru
          _
        // Predicated region
        $region33: #{tpu_custom_call.1} parent=11 // pred_check
          %p250 = pneg %p174
        $region34: #{tpu_custom_call.1} parent=11 // pred_check_branch
          %252 = sbr.rel (%p250) target = $region36
        $region35: #{tpu_custom_call.1} parent=11 // pred_region
          _
        $region36: #{tpu_custom_call.1} parent=11 // pred_fallthru
          _
      $region12: #{tpu_custom_call.1} parent=5 // pred_fallthru
        _
      %p253 = scmp.lt.s32.totalorder %s22, 2
      // Predicated region
      $region37: #{tpu_custom_call.1} parent=5 // pred_check
        %p254 = pneg %p253
      $region38: #{tpu_custom_call.1} parent=5 // pred_check_branch
        %256 = sbr.rel (%p254) target = $region40
      $region39: #{tpu_custom_call.1} parent=5 // pred_region
        // Predicated region
        $region41: #{tpu_custom_call.1} parent=39 // pred_check
          %p257 = pneg %p42
        $region42: #{tpu_custom_call.1} parent=39 // pred_check_branch
          %259 = sbr.rel (%p257) target = $region44
        $region43: #{tpu_custom_call.1} parent=39 // pred_region
          %s260 = sand.u32 %s32, 1
          %s261 = scalar_lea.sflag [#allocation4], %s260
          %s262 = sand.u32 %s32, 1
          %s263 = smul.addr %s262, 8
          %s264 = scalar_lea.vmem [#allocation3], %s263
          %s266 = ssub.s32 128, 128
          %267 = vsyncadd %s261, %s266
          %s268 = smul.addr %s22, 128
          %s269 = scalar_lea.hbm %s0, %s268
          %s271 = sshll.u32 %s264, 4
          %s272 = int_to_ptr.vmem [resolvable:$true] %s271
          %274 = dma.hbm_to_vmem [thread:$0]  %s269, 128, %s272, %s261
        $region44: #{tpu_custom_call.1} parent=39 // pred_fallthru
          _
      $region40: #{tpu_custom_call.1} parent=5 // pred_fallthru
        _
      %p275 = scmp.le.s32.totalorder 1, %s22
      %p276 = scmp.lt.s32.totalorder %s22, 3
      %p277 = pnand %p275, %p276
      %p278 = pneg %p277
      // Predicated region
      $region45: #{tpu_custom_call.1} parent=5 // pred_check
        _
      $region46: #{tpu_custom_call.1} parent=5 // pred_check_branch
        %280 = sbr.rel (%p277) target = $region48
      $region47: #{tpu_custom_call.1} parent=5 // pred_region
        %s281 = ssub.s32 %s22, 1
        %s282 = sand.u32 %s35, 1
        %s283 = scalar_lea.sflag [#allocation4], %s282
        %s284 = sand.u32 %s35, 1
        %s285 = smul.addr %s284, 8
        %s286 = scalar_lea.vmem [#allocation3], %s285
        // Predicated region
        $region49: #{tpu_custom_call.1} parent=47 // pred_check
          %p287 = pneg %p48
        $region50: #{tpu_custom_call.1} parent=47 // pred_check_branch
          %289 = sbr.rel (%p287) target = $region52
        $region51: #{tpu_custom_call.1} parent=47 // pred_region
          %290 = dma.done %s283, 128
        $region52: #{tpu_custom_call.1} parent=47 // pred_fallthru
          _
        // Predicated region
        $region53: #{tpu_custom_call.1} parent=47 // pred_check
          %p291 = pneg %p69
        $region54: #{tpu_custom_call.1} parent=47 // pred_check_branch
          %293 = sbr.rel (%p291) target = $region56
        $region55: #{tpu_custom_call.1} parent=47 // pred_region
          %294 = dma.done [#allocation7], 512
        $region56: #{tpu_custom_call.1} parent=47 // pred_fallthru
          _
        // Predicated region
        $region57: #{tpu_custom_call.1} parent=47 // pred_check
          %p295 = pneg %p111
        $region58: #{tpu_custom_call.1} parent=47 // pred_check_branch
          %297 = sbr.rel (%p295) target = $region60
        $region59: #{tpu_custom_call.1} parent=47 // pred_region
          %298 = dma.done [#allocation7], 2048
        $region60: #{tpu_custom_call.1} parent=47 // pred_fallthru
          _
        %s299 = sand.u32 %s35, 1
        %s300 = scalar_lea.sflag [#allocation4], %s299
        %s301 = sand.u32 %s35, 1
        %s302 = smul.addr %s301, 8
        %s303 = scalar_lea.vmem [#allocation3], %s302
        %p304 = pneg %p48
        %p305 = pneg %p45
        %p306 = pneg %p69
        %p307 = pneg %p66
        %p308 = pneg %p90
        %p309 = pneg %p87
        %p310 = pneg %p111
        %p311 = pneg %p108
        %p312 = pneg %p132
        %p313 = pneg %p129
        %p314 = pneg %p153
        %p315 = pneg %p150
        %p316 = pneg %p174
        %p317 = pneg %p171
        %p318 = pneg %p200
        %p319 = pneg %p197
        %s320 = sand.u32 %s187, 1
        %s321 = scalar_lea.sflag [#allocation5], %s320
        %s322 = sand.u32 %s187, 1
        %s323 = scalar_lea.vmem [#allocation9], %s322
        %v325 = vld [vmem:[%s286] sm:$0xff]
        %v326 = vld [vmem:[#allocation6] sm:$0xff]
        %v327 = vld [vmem:[#allocation6 + $0x8] sm:$0xff]
        %v328 = vld [vmem:[#allocation6 + $0x10] sm:$0xff]
        %v329 = vld [vmem:[#allocation6 + $0x18] sm:$0xff]
        %v330 = vpack.c.bf16 %v327, %v326
        %v331 = vpack.c.bf16 %v329, %v328
        %v332 = vld [vmem:[%s2] sm:$0x1]
        %v333 = vpack.c.bf16 %v325, %v325
        %v335 = vlaneseq
        %v336 = vshrl.u32 %v335, 7
        %v337 = vsub.s32 0, %v336
        %v338 = vrot.slane %v332, %v337
        %vm340 = vcmask 261120
        %v342 = vsel %vm340, %v333, 0
        %344 = vmatprep.subr.bf16.mxu0 0
        %345 = vmatpush1.bf16.msra.mxu0 %v330
        %346 = vmatprep.subr.bf16.mxu0 0
        %347 = vmatpush1.bf16.msra.mxu0 %v331
        %348 = vmatprep.subr.bf16.mxu0 0
        %349 = vmatpush1.bf16.msra.mxu0 0
        %350 = vmatprep.subr.bf16.mxu0 0
        %351 = vmatpush1.bf16.msra.mxu0 0
        %352 = vmatprep.subr.bf16.mxu0 0
        %353 = vmatpush1.bf16.msra.mxu0 0
        %354 = vmatprep.subr.bf16.mxu0 0
        %355 = vmatpush1.bf16.msra.mxu0 0
        %356 = vmatprep.subr.bf16.mxu0 0
        %357 = vmatpush1.bf16.msra.mxu0 0
        %358 = vmatprep.subr.bf16.mxu0 0
        %359 = vmatpush1.bf16.msra.mxu0 0
        %360 = vmatprep.subr.bf16.mxu0 0
        %361 = vmatpush1.bf16.msra.mxu0 0
        %362 = vmatprep.subr.bf16.mxu0 0
        %363 = vmatpush1.bf16.msra.mxu0 0
        %364 = vmatprep.subr.bf16.mxu0 0
        %365 = vmatpush1.bf16.msra.mxu0 0
        %366 = vmatprep.subr.bf16.mxu0 0
        %367 = vmatpush1.bf16.msra.mxu0 0
        %368 = vmatprep.subr.bf16.mxu0 0
        %369 = vmatpush1.bf16.msra.mxu0 0
        %370 = vmatprep.subr.bf16.mxu0 0
        %371 = vmatpush1.bf16.msra.mxu0 0
        %372 = vmatprep.subr.bf16.mxu0 0
        %373 = vmatpush1.bf16.msra.mxu0 0
        %374 = vmatprep.subr.bf16.mxu0 0
        %375 = vmatpush1.bf16.msra.mxu0 0
        %376 = vmatprep.mubr.bf16.mxu0 0
        %377 = vmatmul.mubr.bf16.gmra.mrb[0].mxu0 %v342
        %v378 = vpop.f32.mrb[0].mxu0
        %v379 = vadd.f32 %v338, %v378
        %v380 = vpop.f32.mrb[0].mxu0
        %v381 = vpop.f32.mrb[0].mxu0
        %v382 = vpop.f32.mrb[0].mxu0
        %383 = vdwg.mxu0
        %v384 = vtanh.pop %v379
        %v385 = vld [vmem:[#allocation8] sm:$0xff]
        %v386 = vld [vmem:[#allocation8 + $0x8] sm:$0xff]
        %v387 = vld [vmem:[#allocation8 + $0x10] sm:$0xff]
        %v388 = vld [vmem:[#allocation8 + $0x18] sm:$0xff]
        %v389 = vld [vmem:[#allocation8 + $0x20] sm:$0xff]
        %v390 = vld [vmem:[#allocation8 + $0x28] sm:$0xff]
        %v391 = vld [vmem:[#allocation8 + $0x30] sm:$0xff]
        %v392 = vld [vmem:[#allocation8 + $0x38] sm:$0xff]
        %v393 = vld [vmem:[#allocation8 + $0x40] sm:$0xff]
        %v394 = vld [vmem:[#allocation8 + $0x48] sm:$0xff]
        %v395 = vld [vmem:[#allocation8 + $0x50] sm:$0xff]
        %v396 = vld [vmem:[#allocation8 + $0x58] sm:$0xff]
        %v397 = vld [vmem:[#allocation8 + $0x60] sm:$0xff]
        %v398 = vld [vmem:[#allocation8 + $0x68] sm:$0xff]
        %v399 = vld [vmem:[#allocation8 + $0x70] sm:$0xff]
        %v400 = vld [vmem:[#allocation8 + $0x78] sm:$0xff]
        %v401 = vpack.c.bf16 %v386, %v385
        %v402 = vpack.c.bf16 %v388, %v387
        %v403 = vpack.c.bf16 %v390, %v389
        %v404 = vpack.c.bf16 %v392, %v391
        %v405 = vpack.c.bf16 %v394, %v393
        %v406 = vpack.c.bf16 %v396, %v395
        %v407 = vpack.c.bf16 %v398, %v397
        %v408 = vpack.c.bf16 %v400, %v399
        %v409 = vld [vmem:[%s4] sm:$0x1]
        %v410 = vpack.c.bf16 %v384, %v384
        %v412 = vlaneseq
        %v413 = vshrl.u32 %v412, 7
        %v414 = vsub.s32 0, %v413
        %v415 = vrot.slane %v409, %v414
        %417 = vmatprep.subr.bf16.mxu0 0
        %418 = vmatpush1.bf16.msra.mxu0 %v401
        %419 = vmatprep.subr.bf16.mxu0 0
        %420 = vmatpush1.bf16.msra.mxu0 %v402
        %421 = vmatprep.subr.bf16.mxu0 0
        %422 = vmatpush1.bf16.msra.mxu0 %v403
        %423 = vmatprep.subr.bf16.mxu0 0
        %424 = vmatpush1.bf16.msra.mxu0 %v404
        %425 = vmatprep.subr.bf16.mxu0 0
        %426 = vmatpush1.bf16.msra.mxu0 %v405
        %427 = vmatprep.subr.bf16.mxu0 0
        %428 = vmatpush1.bf16.msra.mxu0 %v406
        %429 = vmatprep.subr.bf16.mxu0 0
        %430 = vmatpush1.bf16.msra.mxu0 %v407
        %431 = vmatprep.subr.bf16.mxu0 0
        %432 = vmatpush1.bf16.msra.mxu0 %v408
        %433 = vmatprep.subr.bf16.mxu0 0
        %434 = vmatpush1.bf16.msra.mxu0 0
        %435 = vmatprep.subr.bf16.mxu0 0
        %436 = vmatpush1.bf16.msra.mxu0 0
        %437 = vmatprep.subr.bf16.mxu0 0
        %438 = vmatpush1.bf16.msra.mxu0 0
        %439 = vmatprep.subr.bf16.mxu0 0
        %440 = vmatpush1.bf16.msra.mxu0 0
        %441 = vmatprep.subr.bf16.mxu0 0
        %442 = vmatpush1.bf16.msra.mxu0 0
        %443 = vmatprep.subr.bf16.mxu0 0
        %444 = vmatpush1.bf16.msra.mxu0 0
        %445 = vmatprep.subr.bf16.mxu0 0
        %446 = vmatpush1.bf16.msra.mxu0 0
        %447 = vmatprep.subr.bf16.mxu0 0
        %448 = vmatpush1.bf16.msra.mxu0 0
        %449 = vmatprep.mubr.bf16.mxu0 0
        %450 = vmatmul.mubr.bf16.gmra.mrb[0].mxu0 %v410
        %v451 = vpop.f32.mrb[0].mxu0
        %v452 = vadd.f32 %v415, %v451
        %v453 = vpop.f32.mrb[0].mxu0
        %v454 = vpop.f32.mrb[0].mxu0
        %v455 = vpop.f32.mrb[0].mxu0
        %456 = vdwg.mxu0
        %v457 = vtanh.pop %v452
        %v458 = vld [vmem:[%s5] sm:$0x1]
        %v459 = vpack.c.bf16 %v458, %v458
        %v460 = vld [vmem:[#allocation2] sm:$0x1]
        %v461 = vpack.c.bf16 %v457, %v457
        %463 = vset.pattern.permute.xlu0 0
        %464 = vperm.xlu0 %463, %v460
        %v465 = vpop.permute.xlu0 %464
        %v467 = vlaneseq
        %v468 = vshrl.u32 %v467, 7
        %v469 = vsub.s32 0, %v468
        %v470 = vrot.slane %v465, %v469
        %471 = vmatprep.subr.bf16.mxu0 0
        %472 = vmatpush1.bf16.xpose.msra.mxu0 %v461
        %473 = vmatprep.subr.bf16.mxu0 0
        %474 = vmatpush1.bf16.xpose.msra.mxu0 0
        %475 = vmatprep.subr.bf16.mxu0 0
        %476 = vmatpush1.bf16.xpose.msra.mxu0 0
        %477 = vmatprep.subr.bf16.mxu0 0
        %478 = vmatpush1.bf16.xpose.msra.mxu0 0
        %479 = vmatprep.subr.bf16.mxu0 0
        %480 = vmatpush1.bf16.xpose.msra.mxu0 0
        %481 = vmatprep.subr.bf16.mxu0 0
        %482 = vmatpush1.bf16.xpose.msra.mxu0 0
        %483 = vmatprep.subr.bf16.mxu0 0
        %484 = vmatpush1.bf16.xpose.msra.mxu0 0
        %485 = vmatprep.subr.bf16.mxu0 0
        %486 = vmatpush1.bf16.xpose.msra.mxu0 0
        %487 = vmatprep.subr.bf16.mxu0 0
        %488 = vmatpush1.bf16.xpose.msra.mxu0 0
        %489 = vmatprep.subr.bf16.mxu0 0
        %490 = vmatpush1.bf16.xpose.msra.mxu0 0
        %491 = vmatprep.subr.bf16.mxu0 0
        %492 = vmatpush1.bf16.xpose.msra.mxu0 0
        %493 = vmatprep.subr.bf16.mxu0 0
        %494 = vmatpush1.bf16.xpose.msra.mxu0 0
        %495 = vmatprep.subr.bf16.mxu0 0
        %496 = vmatpush1.bf16.xpose.msra.mxu0 0
        %497 = vmatprep.subr.bf16.mxu0 0
        %498 = vmatpush1.bf16.xpose.msra.mxu0 0
        %499 = vmatprep.subr.bf16.mxu0 0
        %500 = vmatpush1.bf16.xpose.msra.mxu0 0
        %501 = vmatprep.subr.bf16.mxu0 0
        %502 = vmatpush1.bf16.xpose.msra.mxu0 0
        %503 = vmatprep.mubr.bf16.mxu0 0
        %504 = vmatmul.mubr.bf16.gmra.mrb[0].mxu0 %v459
        %v505 = vpop.f32.mrb[0].mxu0
        %v506 = vadd.f32 %v470, %v505
        %v507 = vpop.f32.mrb[0].mxu0
        %v508 = vpop.f32.mrb[0].mxu0
        %v509 = vpop.f32.mrb[0].mxu0
        %510 = vdwg.mxu0
        %vm511 = vcmask 57344
        %512 = vst.msk [vmem:[%s323] sm:$0x1] %vm511, %v506
        %s513 = sand.u32 %s187, 1
        %s514 = scalar_lea.sflag [#allocation5], %s513
        %s515 = sand.u32 %s187, 1
        %s516 = scalar_lea.vmem [#allocation9], %s515
        // Predicated region
        $region61: #{tpu_custom_call.1} parent=47 // pred_check
          %p517 = pneg %p197
        $region62: #{tpu_custom_call.1} parent=47 // pred_check_branch
          %519 = sbr.rel (%p517) target = $region64
        $region63: #{tpu_custom_call.1} parent=47 // pred_region
          %s521 = ssub.s32 16, 16
          %522 = vsyncadd %s514, %s521
          %s523 = smul.addr %s27, 16
          %s524 = scalar_lea.hbm %s7, %s523
          %s526 = sshll.u32 %s516, 4
          %s527 = int_to_ptr.vmem [resolvable:$true] %s526
          %529 = dma.vmem_to_hbm [thread:$0]  %s527, 16, %s524, %s514
        $region64: #{tpu_custom_call.1} parent=47 // pred_fallthru
          _
      $region48: #{tpu_custom_call.1} parent=5 // pred_fallthru
        _
      %p530 = scmp.le.s32.totalorder 2, %s22
      // Predicated region
      $region65: #{tpu_custom_call.1} parent=5 // pred_check
        %p531 = pneg %p530
      $region66: #{tpu_custom_call.1} parent=5 // pred_check_branch
        %533 = sbr.rel (%p531) target = $region68
      $region67: #{tpu_custom_call.1} parent=5 // pred_region
        %s534 = ssub.s32 %s22, 2
        // Predicated region
        $region69: #{tpu_custom_call.1} parent=67 // pred_check
          %p535 = pneg %p203
        $region70: #{tpu_custom_call.1} parent=67 // pred_check_branch
          %537 = sbr.rel (%p535) target = $region72
        $region71: #{tpu_custom_call.1} parent=67 // pred_region
          %s538 = sand.u32 %s188, 1
          %s539 = scalar_lea.sflag [#allocation5], %s538
          %s540 = sand.u32 %s188, 1
          %s541 = scalar_lea.vmem [#allocation9], %s540
          %542 = dma.done %s539, 16
        $region72: #{tpu_custom_call.1} parent=67 // pred_fallthru
          _
      $region68: #{tpu_custom_call.1} parent=5 // pred_fallthru
        _
    $region6: #{tpu_custom_call.1} parent=1 // loop_footer
      %s26 = sadd.s32 1, %s22
    $region7: #{tpu_custom_call.1} parent=1 // loop_footer_branch
      %21 = sbr.rel target = $region3
    $region8: #{tpu_custom_call.1} parent=1 // loop_exit
      _
    %543 = vsyncpa [#allocation4], 1
    %s544 = scalar_lea.sflag [#allocation4], 1
    %545 = vsyncpa %s544, 1
    %546 = vsyncpa [#allocation7], 1
    %547 = vsyncpa [#allocation5], 1
    %s548 = scalar_lea.sflag [#allocation5], 1
    %549 = vsyncpa %s548, 1

</llo_original>
